<compile_context>
chip_gen: v7x
topology: tpu7x:2x2x1
jax: 0.10.0
libtpu: 0.0.40
codegen_flags: <defaults>
</compile_context>

<pallas_src>
import functools

import jax
import jax.numpy as jnp
from jax.experimental import pallas as pl
from jax.experimental.pallas import tpu as pltpu


def _layernorm_kernel(x_ref, params_ref, o_ref, *, eps: float):
    # x_ref: (tile_rows, features) block in native input dtype.
    x = x_ref[...].astype(jnp.float32)
    n = x.shape[-1]

    # Two-pass moments (matches torch.std numerics; the kernel is HBM-bound so
    # the extra cross-lane reduction is hidden under the DMA).
    mean = jnp.mean(x, axis=-1, keepdims=True)
    diff = x - mean  # the only f32 block needed past this point
    # Unbiased (N-1) variance, eps added to std — exactly like the module.
    # (features must be > 1, as with torch.std; n==1 would divide by zero.)
    var = jnp.sum(diff * diff, axis=-1, keepdims=True) * jnp.float32(1.0 / (n - 1))
    std = jnp.sqrt(var)

    # Exact per-row reciprocal: only tile_rows divides per block, so it is
    # essentially free and keeps parity with PyTorch's (x-mean)/(std+eps).
    inv = jnp.float32(1.0) / (std + jnp.float32(eps))  # (tile_rows, 1)

    params = params_ref[...].astype(jnp.float32)  # (2, features)
    alpha = params[0:1, :]
    bias = params[1:2, :]

    o_ref[...] = ((diff * inv) * alpha + bias).astype(o_ref.dtype)


def _sublane_multiple(itemsize: int) -> int:
    # Packed-dtype sublane granularity: f32 -> 8, bf16/f16 -> 16, int8/fp8 -> 32.
    if itemsize >= 4:
        return 8
    if itemsize == 2:
        return 16
    return 32


def _round_up(x: int, m: int) -> int:
    return ((x + m - 1) // m) * m


def _pick_tile_rows(rows: int, features: int,
                    in_itemsize: int, out_itemsize: int) -> int:
    sub = _sublane_multiple(in_itemsize)
    # ~10 MiB total footprint: double-buffered input + output blocks plus ~2
    # live f32 temporaries inside the kernel body.  1-4 MiB blocks already hit
    # ~85% of the HBM roofline; anything bigger just inflates VMEM pressure.
    budget = 10 * 1024 * 1024
    bytes_per_row = (2 * features * in_itemsize       # double-buffered input
                     + 2 * features * out_itemsize    # double-buffered output
                     + 2 * features * 4)              # in-kernel f32 temporaries
    max_rows = max(sub, budget // max(bytes_per_row, 1))
    tile_rows = max(sub, min(2048, (max_rows // sub) * sub))
    # Keep >=4 grid steps when rows allow, so v7x's two TensorCores both get
    # work (dimension_semantics=("parallel",) needs >=2 iterations to shard).
    tile_rows = min(tile_rows, max(sub, _round_up(-(-rows // 4), sub)))
    # Never allocate a block bigger than the (sublane-rounded) row count.
    tile_rows = min(tile_rows, _round_up(rows, sub))
    return max(sub, tile_rows)


def layer_norm(x, alpha, bias, *, eps: float = 1e-6,
               tile_rows: int | None = None, out_dtype=jnp.float32):
    """LayerNormalization forward, matching the PyTorch module.

    out_dtype defaults to float32 (exact x.float() semantics); pass
    jnp.bfloat16 to cut writeback bytes when downstream tolerates it
    (accumulation stays f32 inside the kernel either way).
    """
    orig_shape = x.shape
    features = orig_shape[-1]
    x2 = x.reshape(-1, features)  # native dtype — no HBM upcast copy
    rows = x2.shape[0]
    out_dtype = jnp.dtype(out_dtype)

    if tile_rows is None:
        tile_rows = _pick_tile_rows(rows, features,
                                    x2.dtype.itemsize, out_dtype.itemsize)

    # Single stacked parameter array: row 0 = alpha, row 1 = bias.
    params = jnp.stack(
        [jnp.asarray(alpha, jnp.float32).reshape(features),
         jnp.asarray(bias, jnp.float32).reshape(features)],
        axis=0,
    )

    grid = (pl.cdiv(rows, tile_rows),)

    # Advisory cost so XLA can overlap neighbouring HLO ops around this
    # mem-bound custom call.
    cost = pl.CostEstimate(
        flops=7 * rows * features,
        transcendentals=2 * rows,  # sqrt + per-row reciprocal
        bytes_accessed=(rows * features * (x2.dtype.itemsize + out_dtype.itemsize)
                        + 2 * features * 4),
    )

    out = pl.pallas_call(
        functools.partial(_layernorm_kernel, eps=eps),
        out_shape=jax.ShapeDtypeStruct((rows, features), out_dtype),
        grid_spec=pltpu.PrefetchScalarGridSpec(
            num_scalar_prefetch=0,
            grid=grid,
            in_specs=[
                pl.BlockSpec((tile_rows, features), lambda i: (i, 0)),
                pl.BlockSpec((2, features), lambda i: (0, 0)),
            ],
            out_specs=pl.BlockSpec((tile_rows, features), lambda i: (i, 0)),
        ),
        # No vmem_limit override: <=10 MiB footprint fits the default scoped
        # VMEM on v5e (16 MiB) and v6e/v7x (32 MiB).
        compiler_params=pltpu.CompilerParams(
            dimension_semantics=("parallel",),  # sharded across TCs on v7x
        ),
        cost_estimate=cost,
    )(x2, params)

    return out.reshape(orig_shape)


def decoder_forward(x, alpha, bias, *, eps: float = 1e-6):
    # TODO(synk): Decoder.layers is an arbitrary nn.ModuleList passed in at
    # construction; those layers are not specified and cannot be translated.
    # Only the final LayerNormalization is implemented.
    return layer_norm(x, alpha, bias, eps=eps)


if __name__ == "__main__":
    key = jax.random.PRNGKey(0)
    batch, seq, hidden = 2, 8, 32

    x = jax.random.normal(key, (batch, seq, hidden), dtype=jnp.float32)

    # Deterministic parameter init, matching nn.Parameter(torch.ones/zeros).
    alpha = jnp.ones((hidden,), dtype=jnp.float32)
    bias = jnp.zeros((hidden,), dtype=jnp.float32)

    y = decoder_forward(x, alpha, bias, eps=1e-6)
    y = jax.block_until_ready(y)

    # Reference check (plain JAX, unbiased std like torch.std, eps on std).
    xf = x.astype(jnp.float32)
    mean = xf.mean(axis=-1, keepdims=True)
    std = jnp.sqrt(((xf - mean) ** 2).sum(axis=-1, keepdims=True) / (hidden - 1))
    ref = alpha * (xf - mean) / (std + 1e-6) + bias

    assert y.shape == x.shape and y.dtype == jnp.float32
    assert jnp.allclose(y, ref, atol=1e-4, rtol=1e-4), "mismatch vs reference"

    print("KERNEL_OK")
</pallas_src>

<mosaic_0001>
module attributes {stable_mosaic.version = 11 : i64} {
  func.func @_layernorm_kernel(%arg0: i32, %arg1: memref<8x32xf32, #tpu.memory_space<vmem>>, %arg2: memref<2x32xf32, #tpu.memory_space<vmem>>, %arg3: memref<8x32xf32, #tpu.memory_space<vmem>>) attributes {dimension_semantics = [#tpu.dimension_semantics<parallel>], iteration_bounds = array<i64: 2>, scalar_prefetch = 0 : i64, scratch_operands = 0 : i64, tpu.core_type = #tpu.core_type<tc>, window_params = [{transform_indices = @transform_0, window_bounds = array<i64: 8, 32>}, {pipeline_mode = #tpu.pipeline_mode<synchronous>, transform_indices = @transform_1, window_bounds = array<i64: 2, 32>}, {transform_indices = @transform_2, window_bounds = array<i64: 8, 32>}]} {
    %c0 = arith.constant 0 : index
    %c0_0 = arith.constant 0 : index
    %0 = vector.load %arg1[%c0, %c0_0] : memref<8x32xf32, #tpu.memory_space<vmem>>, vector<8x32xf32>
    %cst = arith.constant dense<0.000000e+00> : vector<8xf32>
    %1 = vector.multi_reduction <add>, %0, %cst [1] : vector<8x32xf32> to vector<8xf32>
    %2 = vector.shape_cast %1 : vector<8xf32> to vector<8x1xf32>
    %cst_1 = arith.constant 3.200000e+01 : f32
    %3 = vector.broadcast %cst_1 : f32 to vector<8x1xf32>
    %4 = arith.divf %2, %3 : vector<8x1xf32>
    %5 = vector.broadcast %4 : vector<8x1xf32> to vector<8x32xf32>
    %6 = arith.subf %0, %5 : vector<8x32xf32>
    %7 = arith.mulf %6, %6 : vector<8x32xf32>
    %cst_2 = arith.constant dense<0.000000e+00> : vector<8xf32>
    %8 = vector.multi_reduction <add>, %7, %cst_2 [1] : vector<8x32xf32> to vector<8xf32>
    %9 = vector.shape_cast %8 : vector<8xf32> to vector<8x1xf32>
    %cst_3 = arith.constant 0.0322580636 : f32
    %10 = vector.broadcast %cst_3 : f32 to vector<8x1xf32>
    %11 = arith.mulf %9, %10 : vector<8x1xf32>
    %12 = math.sqrt %11 : vector<8x1xf32>
    %cst_4 = arith.constant 9.99999997E-7 : f32
    %13 = vector.broadcast %cst_4 : f32 to vector<8x1xf32>
    %14 = arith.addf %12, %13 : vector<8x1xf32>
    %cst_5 = arith.constant 1.000000e+00 : f32
    %15 = vector.broadcast %cst_5 : f32 to vector<8x1xf32>
    %16 = arith.divf %15, %14 : vector<8x1xf32>
    %c0_6 = arith.constant 0 : index
    %c0_7 = arith.constant 0 : index
    %17 = vector.load %arg2[%c0_6, %c0_7] : memref<2x32xf32, #tpu.memory_space<vmem>>, vector<2x32xf32>
    %18 = vector.extract_strided_slice %17 {offsets = [0, 0], sizes = [1, 32], strides = [1, 1]} : vector<2x32xf32> to vector<1x32xf32>
    %19 = vector.extract_strided_slice %17 {offsets = [1, 0], sizes = [1, 32], strides = [1, 1]} : vector<2x32xf32> to vector<1x32xf32>
    %20 = vector.broadcast %16 : vector<8x1xf32> to vector<8x32xf32>
    %21 = arith.mulf %6, %20 : vector<8x32xf32>
    %22 = vector.broadcast %18 : vector<1x32xf32> to vector<8x32xf32>
    %23 = arith.mulf %21, %22 : vector<8x32xf32>
    %24 = vector.broadcast %19 : vector<1x32xf32> to vector<8x32xf32>
    %25 = arith.addf %23, %24 : vector<8x32xf32>
    %c0_8 = arith.constant 0 : index
    %c0_9 = arith.constant 0 : index
    %26 = vector.load %arg3[%c0_8, %c0_9] : memref<8x32xf32, #tpu.memory_space<vmem>>, vector<8x32xf32>
    tpu.vector_store %arg3[%c0_8, %c0_9], %25 {strides = array<i32>} : memref<8x32xf32, #tpu.memory_space<vmem>>, vector<8x32xf32>,
    return
  }
  func.func @transform_0(%arg0: i32) -> (i32, i32) {
    %c0_i32 = arith.constant 0 : i32
    %c0_i32_0 = arith.constant 0 : i32
    return %arg0, %c0_i32 : i32, i32
  }
  func.func @transform_1(%arg0: i32) -> (i32, i32) {
    %c0_i32 = arith.constant 0 : i32
    %c0_i32_0 = arith.constant 0 : i32
    %c0_i32_1 = arith.constant 0 : i32
    return %c0_i32, %c0_i32_0 : i32, i32
  }
  func.func @transform_2(%arg0: i32) -> (i32, i32) {
    %c0_i32 = arith.constant 0 : i32
    %c0_i32_0 = arith.constant 0 : i32
    return %arg0, %c0_i32 : i32, i32
  }
}

</mosaic_0001>

<llo_original>
// kernel: tpu_custom_call.1
$region0: #{tpu_custom_call.1}
  #allocation0 [shape = 'u32[]', space=smem, size = 0x4, offset = 0x4, fixed_abs, tag = 'smem constant byte address 0x4 - core index']
  #allocation1 [shape = 'u32[144,128]{1,0:T(1,128)}', space=vmem, size = 0x12000, scoped, tag = 'internal scratch']
  %s0 = inlined_call_operand.hbm [shape: f32[16,32], index: 0, kind: input, shape index: {}]
  %s1 = inlined_call_operand.vmem [shape: f32[2,32], index: 1, kind: input, shape index: {}]
  %s2 = inlined_call_operand.hbm [shape: f32[16,32], index: 2, kind: output, shape index: {}]
  %s3 = sld [smem:[#allocation0]]
  $region45: #{tpu_custom_call.1} parent=0
    _
  %s5 = ssub.s32 1, %s3
  %s6 = scalar_select 0, %s5, %s3
  $region1: #{tpu_custom_call.1} parent=0
    #allocation2 [shape = 'u8[8192]{0}', space=vmem, size = 0x2000, scoped, tag = 'input window, operand 0']
    #allocation3 [shape = 's32[2]{0}', space=sflag, size = 0x8, scoped, tag = 'scoped memory for tpu_custom_call.1']
    #allocation4 [shape = 's32[2]{0}', space=sflag, size = 0x8, scoped, tag = 'scoped memory for tpu_custom_call.1']
    #allocation5 [shape = 'u8[8192]{0}', space=vmem, size = 0x2000, scoped, tag = 'output window, operand 0']
    %7 = vsyncpa [#allocation3], 0
    %s8 = scalar_lea.sflag [#allocation3], 1
    %9 = vsyncpa %s8, 0
    %10 = vsyncpa [#allocation4], 0
    %s11 = scalar_lea.sflag [#allocation4], 1
    %12 = vsyncpa %s11, 0
    loop: start=0, step=1, limit=4
    $region2: #{tpu_custom_call.1} parent=1 // loop_pre_header
      _
    $region3: #{tpu_custom_call.1} parent=1 // loop_header
      %s14 = sphi 0, %s18
      %p15 = scmp.ge.s32.totalorder %s14, 4
      %s24 = sphi 0, %s26
      %s27 = sphi 0, %s24
      %s28 = sphi 0, %s27
      %s44 = sphi 0, %s28
      %s48 = sphi 0, %s48
      %s50 = sphi 0, %s48
      %s51 = sphi 0, %s50
      %s65 = sphi 0, %s51
      %s71 = sphi 0, %s73
      %s74 = sphi 0, %s71
      %s75 = sphi 0, %s74
      %s91 = sphi 0, %s75
    $region4: #{tpu_custom_call.1} parent=1 // loop_header_branch
      %17 = sbr.rel (%p15) target = $region8
    $region5: #{tpu_custom_call.1} parent=1 // loop_body
      %s19 = ssub.s32 %s14, 1
      %s20 = ssub.s32 %s14, 2
      %s21 = sadd.s32 %s14, 1
      %s22 = ssub.s32 %s14, %s21
      %p23 = scmp.eq.s32.totalorder %s22, 0
      %s25 = sadd.s32 %s24, 1
      %s26 = scalar_select %p23, %s24, %s25
      %p29 = pneg %p23
      %p30 = scmp.eq.s32.totalorder %s14, 1
      %p31 = por %p29, %p30
      %p32 = scmp.ne.s32.totalorder %s24, %s27
      %p33 = scmp.eq.s32.totalorder %s14, 0
      %p34 = por %p32, %p33
      %p35 = scmp.ne.s32.totalorder %s24, %s27
      %p36 = scmp.eq.s32.totalorder %s19, 1
      %p37 = por %p35, %p36
      %p38 = scmp.ne.s32.totalorder %s27, %s28
      %p39 = scmp.eq.s32.totalorder %s19, 0
      %p40 = por %p38, %p39
      %p41 = scmp.ne.s32.totalorder %s27, %s28
      %p42 = scmp.eq.s32.totalorder %s20, 1
      %p43 = por %p41, %p42
      %p45 = scmp.ne.s32.totalorder %s28, %s44
      %p46 = scmp.eq.s32.totalorder %s20, 0
      %p47 = por %p45, %p46
      %s49 = sadd.s32 %s48, 1
      %p52 = scmp.eq.s32.totalorder %s14, 1
      %p53 = scmp.ne.s32.totalorder %s48, %s50
      %p54 = scmp.eq.s32.totalorder %s14, 0
      %p55 = por %p53, %p54
      %p56 = scmp.ne.s32.totalorder %s48, %s50
      %p57 = scmp.eq.s32.totalorder %s19, 1
      %p58 = por %p56, %p57
      %p59 = scmp.ne.s32.totalorder %s50, %s51
      %p60 = scmp.eq.s32.totalorder %s19, 0
      %p61 = por %p59, %p60
      %p62 = scmp.ne.s32.totalorder %s50, %s51
      %p63 = scmp.eq.s32.totalorder %s20, 1
      %p64 = por %p62, %p63
      %p66 = scmp.ne.s32.totalorder %s51, %s65
      %p67 = scmp.eq.s32.totalorder %s20, 0
      %p68 = por %p66, %p67
      %s69 = ssub.s32 %s14, %s21
      %p70 = scmp.eq.s32.totalorder %s69, 0
      %s72 = sadd.s32 %s71, 1
      %s73 = scalar_select %p70, %s71, %s72
      %p76 = pneg %p70
      %p77 = scmp.eq.s32.totalorder %s14, 1
      %p78 = por %p76, %p77
      %p79 = scmp.ne.s32.totalorder %s71, %s74
      %p80 = scmp.eq.s32.totalorder %s14, 0
      %p81 = por %p79, %p80
      %p82 = scmp.ne.s32.totalorder %s71, %s74
      %p83 = scmp.eq.s32.totalorder %s19, 1
      %p84 = por %p82, %p83
      %p85 = scmp.ne.s32.totalorder %s74, %s75
      %p86 = scmp.eq.s32.totalorder %s19, 0
      %p87 = por %p85, %p86
      %p88 = scmp.ne.s32.totalorder %s74, %s75
      %p89 = scmp.eq.s32.totalorder %s20, 1
      %p90 = por %p88, %p89
      %p92 = scmp.ne.s32.totalorder %s75, %s91
      %p93 = scmp.eq.s32.totalorder %s20, 0
      %p94 = por %p92, %p93
      %p95 = scmp.le.s32.totalorder 1, %s14
      %p96 = scmp.lt.s32.totalorder %s14, 3
      %p97 = pnand %p95, %p96
      %p98 = pneg %p97
      // Predicated region
      $region9: #{tpu_custom_call.1} parent=5 // pred_check
        _
      $region10: #{tpu_custom_call.1} parent=5 // pred_check_branch
        %100 = sbr.rel (%p97) target = $region12
      $region11: #{tpu_custom_call.1} parent=5 // pred_region
        %s101 = ssub.s32 %s14, 1
        // Predicated region
        $region13: #{tpu_custom_call.1} parent=11 // pred_check
          %p102 = pneg %p61
        $region14: #{tpu_custom_call.1} parent=11 // pred_check_branch
          %104 = sbr.rel (%p102) target = $region16
        $region15: #{tpu_custom_call.1} parent=11 // pred_region
          _
        $region16: #{tpu_custom_call.1} parent=11 // pred_fallthru
          _
      $region12: #{tpu_custom_call.1} parent=5 // pred_fallthru
        _
      %p105 = scmp.lt.s32.totalorder %s14, 2
      // Predicated region
      $region17: #{tpu_custom_call.1} parent=5 // pred_check
        %p106 = pneg %p105
      $region18: #{tpu_custom_call.1} parent=5 // pred_check_branch
        %108 = sbr.rel (%p106) target = $region20
      $region19: #{tpu_custom_call.1} parent=5 // pred_region
        // Predicated region
        $region21: #{tpu_custom_call.1} parent=19 // pred_check
          %p109 = pneg %p34
        $region22: #{tpu_custom_call.1} parent=19 // pred_check_branch
          %111 = sbr.rel (%p109) target = $region24
        $region23: #{tpu_custom_call.1} parent=19 // pred_region
          %s112 = sand.u32 %s24, 1
          %s113 = scalar_lea.sflag [#allocation3], %s112
          %s114 = sand.u32 %s24, 1
          %s115 = smul.addr %s114, 8
          %s116 = scalar_lea.vmem [#allocation2], %s115
          %s118 = ssub.s32 128, 128
          %119 = vsyncadd %s113, %s118
          %s120 = smul.addr %s14, 128
          %s121 = scalar_lea.hbm %s0, %s120
          %s123 = sshll.u32 %s116, 4
          %s124 = int_to_ptr.vmem [resolvable:$true] %s123
          %126 = dma.hbm_to_vmem [thread:$0]  %s121, 128, %s124, %s113
        $region24: #{tpu_custom_call.1} parent=19 // pred_fallthru
          _
      $region20: #{tpu_custom_call.1} parent=5 // pred_fallthru
        _
      %p127 = scmp.le.s32.totalorder 1, %s14
      %p128 = scmp.lt.s32.totalorder %s14, 3
      %p129 = pnand %p127, %p128
      %p130 = pneg %p129
      // Predicated region
      $region25: #{tpu_custom_call.1} parent=5 // pred_check
        _
      $region26: #{tpu_custom_call.1} parent=5 // pred_check_branch
        %132 = sbr.rel (%p129) target = $region28
      $region27: #{tpu_custom_call.1} parent=5 // pred_region
        %s133 = ssub.s32 %s14, 1
        %s134 = sand.u32 %s27, 1
        %s135 = scalar_lea.sflag [#allocation3], %s134
        %s136 = sand.u32 %s27, 1
        %s137 = smul.addr %s136, 8
        %s138 = scalar_lea.vmem [#allocation2], %s137
        // Predicated region
        $region29: #{tpu_custom_call.1} parent=27 // pred_check
          %p139 = pneg %p40
        $region30: #{tpu_custom_call.1} parent=27 // pred_check_branch
          %141 = sbr.rel (%p139) target = $region32
        $region31: #{tpu_custom_call.1} parent=27 // pred_region
          %142 = dma.done %s135, 128
        $region32: #{tpu_custom_call.1} parent=27 // pred_fallthru
          _
        %s143 = sand.u32 %s27, 1
        %s144 = scalar_lea.sflag [#allocation3], %s143
        %s145 = sand.u32 %s27, 1
        %s146 = smul.addr %s145, 8
        %s147 = scalar_lea.vmem [#allocation2], %s146
        %p148 = pneg %p40
        %p149 = pneg %p37
        %p150 = pneg %p61
        %p151 = pneg %p58
        %p152 = pneg %p87
        %p153 = pneg %p84
        %s154 = sand.u32 %s74, 1
        %s155 = scalar_lea.sflag [#allocation4], %s154
        %s156 = sand.u32 %s74, 1
        %s157 = smul.addr %s156, 8
        %s158 = scalar_lea.vmem [#allocation5], %s157
        %v159 = vld [vmem:[%s138] sm:$0xff]
        %vm160 = vcmask 261120
        %v161 = vsel %vm160, %v159, 0.0
        %162 = vadd.xlane.f32.xlu0 %v161
        %v163 = vpop.xlane.xlu0 %162
        %v164 = vrcp.pop 32.0
        %v165 = vmul.f32 %v163, %v164
        %v166 = vsub.f32 %v159, %v165
        %v167 = vmul.f32 %v166, %v166
        %v168 = vsel %vm160, %v167, 0.0
        %169 = vadd.xlane.f32.xlu0 %v168
        %v170 = vpop.xlane.xlu0 %169
        %v171 = vmul.f32 %v170, 0.032258064
        %v172 = vrsqrt.pop %v171
        %v173 = vmul.f32 %v171, %v172
        %vm174 = vcmp.eq.f32.partialorder %v171, inf
        %v175 = vsel %vm174, %v171, %v173
        %vm176 = vcmp.eq.f32.partialorder %v171, 0.0
        %v177 = vand.u32 %v171, 2147483648
        %v178 = vsel %vm176, %v177, %v175
        %v179 = vadd.f32 %v178, 1e-06
        %v180 = vrcp.pop %v179
        %v181 = vmul.f32 1.0, %v180
        %v182 = vld [vmem:[%s1] sm:$0x3]
        %v183 = vmul.f32 %v166, %v181
        %v184 = vlaneseq
        %v185 = vshrl.u32 %v184, 7
        %v186 = vsub.s32 0, %v185
        %v187 = vrot.slane %v182, %v186
        %v188 = vmul.f32 %v183, %v187
        %v189 = vlaneseq
        %v190 = vshrl.u32 %v189, 7
        %v191 = vsub.s32 1, %v190
        %v192 = vrot.slane %v182, %v191
        %v193 = vadd.f32 %v188, %v192
        %194 = vst.msk [vmem:[%s158] sm:$0xff] %vm160, %v193
        %s195 = sand.u32 %s74, 1
        %s196 = scalar_lea.sflag [#allocation4], %s195
        %s197 = sand.u32 %s74, 1
        %s198 = smul.addr %s197, 8
        %s199 = scalar_lea.vmem [#allocation5], %s198
        // Predicated region
        $region33: #{tpu_custom_call.1} parent=27 // pred_check
          %p200 = pneg %p84
        $region34: #{tpu_custom_call.1} parent=27 // pred_check_branch
          %202 = sbr.rel (%p200) target = $region36
        $region35: #{tpu_custom_call.1} parent=27 // pred_region
          %s204 = ssub.s32 128, 128
          %205 = vsyncadd %s196, %s204
          %s206 = smul.addr %s19, 128
          %s207 = scalar_lea.hbm %s2, %s206
          %s209 = sshll.u32 %s199, 4
          %s210 = int_to_ptr.vmem [resolvable:$true] %s209
          %212 = dma.vmem_to_hbm [thread:$0]  %s210, 128, %s207, %s196
        $region36: #{tpu_custom_call.1} parent=27 // pred_fallthru
          _
      $region28: #{tpu_custom_call.1} parent=5 // pred_fallthru
        _
      %p213 = scmp.le.s32.totalorder 2, %s14
      // Predicated region
      $region37: #{tpu_custom_call.1} parent=5 // pred_check
        %p214 = pneg %p213
      $region38: #{tpu_custom_call.1} parent=5 // pred_check_branch
        %216 = sbr.rel (%p214) target = $region40
      $region39: #{tpu_custom_call.1} parent=5 // pred_region
        %s217 = ssub.s32 %s14, 2
        // Predicated region
        $region41: #{tpu_custom_call.1} parent=39 // pred_check
          %p218 = pneg %p90
        $region42: #{tpu_custom_call.1} parent=39 // pred_check_branch
          %220 = sbr.rel (%p218) target = $region44
        $region43: #{tpu_custom_call.1} parent=39 // pred_region
          %s221 = sand.u32 %s75, 1
          %s222 = scalar_lea.sflag [#allocation4], %s221
          %s223 = sand.u32 %s75, 1
          %s224 = smul.addr %s223, 8
          %s225 = scalar_lea.vmem [#allocation5], %s224
          %226 = dma.done %s222, 128
        $region44: #{tpu_custom_call.1} parent=39 // pred_fallthru
          _
      $region40: #{tpu_custom_call.1} parent=5 // pred_fallthru
        _
    $region6: #{tpu_custom_call.1} parent=1 // loop_footer
      %s18 = sadd.s32 1, %s14
    $region7: #{tpu_custom_call.1} parent=1 // loop_footer_branch
      %13 = sbr.rel target = $region3
    $region8: #{tpu_custom_call.1} parent=1 // loop_exit
      _
    %227 = vsyncpa [#allocation3], 1
    %s228 = scalar_lea.sflag [#allocation3], 1
    %229 = vsyncpa %s228, 1
    %230 = vsyncpa [#allocation4], 1
    %s231 = scalar_lea.sflag [#allocation4], 1
    %232 = vsyncpa %s231, 1

</llo_original>
